<compile_context>
chip_gen: v7x
topology: tpu7x:2x2x1
jax: 0.10.0
libtpu: 0.0.40
codegen_flags: <defaults>
</compile_context>

<pallas_src>
import functools

import jax
import jax.numpy as jnp
from jax import lax
from jax.experimental import pallas as pl
from jax.experimental.pallas import tpu as pltpu


def _round_up(x, m):
    return ((x + m - 1) // m) * m


def logreg_kernel(x_ref, wt_ref, b_ref, o_ref):
    """One batch tile: out = softmax(x @ W_t + b, axis=-1).

    x_ref:  [TB, D]  batch tile (pipelined over the batch grid axis)
    wt_ref: [D, O]   weight, already transposed to MXU-preferred [K, N]; resident
    b_ref:  [1, O]   bias (f32); resident
    o_ref:  [TB, O]  probabilities (f32)
    """
    logits = jnp.dot(x_ref[...], wt_ref[...], preferred_element_type=jnp.float32)
    logits = logits + b_ref[...]                      # broadcast [1, O], f32

    # Numerically stable softmax over the class dim, all math in f32.
    m = jnp.max(logits, axis=-1, keepdims=True)
    e = jnp.exp(logits - m)
    denom = jnp.sum(e, axis=-1, keepdims=True)
    # denom is [TB, 1] -> an exact divide costs nothing measurable vs. the
    # TB*O exps, and keeps rows summing to 1 at f32 precision.
    o_ref[...] = (e / denom).astype(o_ref.dtype)


@functools.partial(jax.jit, static_argnames=("block_b", "compute_dtype", "vmem_budget_mib"))
def logistic_regression_forward(x, weight, bias, *, block_b=1024,
                                compute_dtype=jnp.float32, vmem_budget_mib=32):
    """x: [B, D], weight: [O, D] (PyTorch Linear layout), bias: [O]."""
    B, D = x.shape
    O = weight.shape[0]
    itemsize = jnp.dtype(compute_dtype).itemsize

    # ---- VMEM-budgeted batch tile -------------------------------------------
    # Physical VMEM layout pads the last dim to 128 lanes; account for that.
    d_lane = _round_up(D, 128)
    o_lane = _round_up(O, 128)
    budget = vmem_budget_mib * 1024 * 1024            # safe on v5e/v6e/v7x (per-TC)
    resident = 2 * _round_up(D, 8) * o_lane * itemsize + 2 * 8 * o_lane * 4
    per_row = 2 * d_lane * itemsize + 4 * o_lane * 4  # x dbl-buf + out dbl-buf + f32 temps
    if budget > resident:
        tb = (budget - resident) // per_row
    else:
        tb = 8
    tb = min(tb, block_b, _round_up(B, 8))
    if B >= 16:
        # Keep >= 2 batch tiles so the "parallel" axis can shard across v7x's
        # two TensorCores (neutral on v5e/v6e).
        tb = min(tb, _round_up(-(-B // 2), 8))
    tb = max(8, (tb // 8) * 8)

    grid = (pl.cdiv(B, tb),)
    est_usage = resident + tb * per_row
    vmem_limit = int(min(max(2 * est_usage, 16 * 1024 * 1024), 48 * 1024 * 1024))

    # ---- one-time layout prep (XLA side, fully hidden for repeated calls) ----
    w_t = weight.astype(compute_dtype).T              # [D, O]: MXU-preferred [K, N]
    b_row = bias.astype(jnp.float32).reshape(1, O)    # bias / softmax math stays f32
    x_c = x.astype(compute_dtype)

    out = pl.pallas_call(
        logreg_kernel,
        out_shape=jax.ShapeDtypeStruct((B, O), jnp.float32),
        grid_spec=pltpu.PrefetchScalarGridSpec(
            num_scalar_prefetch=0,
            grid=grid,
            in_specs=[
                pl.BlockSpec((tb, D), lambda i: (i, 0)),   # pipelined batch tile
                pl.BlockSpec((D, O), lambda i: (0, 0)),    # resident weight
                pl.BlockSpec((1, O), lambda i: (0, 0)),    # resident bias
            ],
            out_specs=pl.BlockSpec((tb, O), lambda i: (i, 0)),
        ),
        compiler_params=pltpu.CompilerParams(
            dimension_semantics=("parallel",),
            vmem_limit_bytes=vmem_limit,
        ),
    )(x_c, w_t, b_row)

    return out


if __name__ == "__main__":
    # Small shapes consistent with the module: input_dim=32, output_dim=16, batch=8.
    B, input_dim, output_dim = 8, 32, 16
    key = jax.random.PRNGKey(0)
    kx, kw, kb = jax.random.split(key, 3)

    x = jax.random.normal(kx, (B, input_dim), dtype=jnp.float32)
    # Deterministic "Linear" params (PyTorch layout: weight [out, in], bias [out]).
    bound = 1.0 / (input_dim ** 0.5)
    weight = jax.random.uniform(kw, (output_dim, input_dim),
                                minval=-bound, maxval=bound, dtype=jnp.float32)
    bias = jax.random.uniform(kb, (output_dim,),
                              minval=-bound, maxval=bound, dtype=jnp.float32)

    # Quantize x / weight to bf16-representable values so the tolerance check is
    # independent of which MXU f32-emulation pass count the compiler picks
    # (products of bf16-representable values are exact in f32 accumulation).
    x = x.astype(jnp.bfloat16).astype(jnp.float32)
    weight = weight.astype(jnp.bfloat16).astype(jnp.float32)

    out = jax.block_until_ready(logistic_regression_forward(x, weight, bias))

    # Reference in plain JAX at highest matmul precision.
    ref = jax.nn.softmax(
        jnp.dot(x, weight.T, precision=lax.Precision.HIGHEST) + bias, axis=1)

    assert out.shape == (B, output_dim)
    assert out.dtype == jnp.float32
    assert jnp.allclose(out, ref, atol=1e-5, rtol=1e-5)
    assert jnp.allclose(jnp.sum(out, axis=1), 1.0, atol=1e-5)

    # bf16 activation/weight path (halves the dominant x HBM stream for large B);
    # softmax math stays f32, so it matches the reference tightly here.
    out_bf16 = jax.block_until_ready(
        logistic_regression_forward(x, weight, bias, compute_dtype=jnp.bfloat16))
    assert jnp.allclose(out_bf16, ref, atol=1e-4, rtol=1e-4)

    print("KERNEL_OK")
</pallas_src>

<mosaic_0001>
module attributes {stable_mosaic.version = 11 : i64} {
  func.func @logreg_kernel(%arg0: i32, %arg1: memref<8x32xf32, #tpu.memory_space<vmem>>, %arg2: memref<32x16xf32, #tpu.memory_space<vmem>>, %arg3: memref<1x16xf32, #tpu.memory_space<vmem>>, %arg4: memref<8x16xf32, #tpu.memory_space<vmem>>) attributes {dimension_semantics = [#tpu.dimension_semantics<parallel>], iteration_bounds = array<i64: 1>, scalar_prefetch = 0 : i64, scratch_operands = 0 : i64, tpu.core_type = #tpu.core_type<tc>, window_params = [{transform_indices = @transform_0, window_bounds = array<i64: 8, 32>}, {pipeline_mode = #tpu.pipeline_mode<synchronous>, transform_indices = @transform_1, window_bounds = array<i64: 32, 16>}, {pipeline_mode = #tpu.pipeline_mode<synchronous>, transform_indices = @transform_2, window_bounds = array<i64: 1, 16>}, {transform_indices = @transform_3, window_bounds = array<i64: 8, 16>}]} {
    %c0 = arith.constant 0 : index
    %c0_0 = arith.constant 0 : index
    %0 = vector.load %arg1[%c0, %c0_0] : memref<8x32xf32, #tpu.memory_space<vmem>>, vector<8x32xf32>
    %c0_1 = arith.constant 0 : index
    %c0_2 = arith.constant 0 : index
    %1 = vector.load %arg2[%c0_1, %c0_2] : memref<32x16xf32, #tpu.memory_space<vmem>>, vector<32x16xf32>
    %cst = arith.constant dense<0.000000e+00> : vector<8x16xf32>
    %2 = tpu.matmul %0, %1, %cst {dimension_numbers = #tpu.dot_dimension_numbers<[1], [0], [0], [1], [0, 0, 1, 1], [], []>} : vector<8x32xf32>, vector<32x16xf32>, vector<8x16xf32> -> vector<8x16xf32>
    %c0_3 = arith.constant 0 : index
    %c0_4 = arith.constant 0 : index
    %3 = vector.load %arg3[%c0_3, %c0_4] : memref<1x16xf32, #tpu.memory_space<vmem>>, vector<1x16xf32>
    %4 = vector.broadcast %3 : vector<1x16xf32> to vector<8x16xf32>
    %5 = arith.addf %2, %4 : vector<8x16xf32>
    %cst_5 = arith.constant dense<0xFF800000> : vector<8xf32>
    %6 = vector.multi_reduction <maximumf>, %5, %cst_5 [1] : vector<8x16xf32> to vector<8xf32>
    %7 = vector.shape_cast %6 : vector<8xf32> to vector<8x1xf32>
    %8 = vector.broadcast %7 : vector<8x1xf32> to vector<8x16xf32>
    %9 = arith.subf %5, %8 : vector<8x16xf32>
    %10 = math.exp %9 : vector<8x16xf32>
    %cst_6 = arith.constant dense<0.000000e+00> : vector<8xf32>
    %11 = vector.multi_reduction <add>, %10, %cst_6 [1] : vector<8x16xf32> to vector<8xf32>
    %12 = vector.shape_cast %11 : vector<8xf32> to vector<8x1xf32>
    %13 = vector.broadcast %12 : vector<8x1xf32> to vector<8x16xf32>
    %14 = arith.divf %10, %13 : vector<8x16xf32>
    %c0_7 = arith.constant 0 : index
    %c0_8 = arith.constant 0 : index
    %15 = vector.load %arg4[%c0_7, %c0_8] : memref<8x16xf32, #tpu.memory_space<vmem>>, vector<8x16xf32>
    tpu.vector_store %arg4[%c0_7, %c0_8], %14 {strides = array<i32>} : memref<8x16xf32, #tpu.memory_space<vmem>>, vector<8x16xf32>,
    return
  }
  func.func @transform_0(%arg0: i32) -> (i32, i32) {
    %c0_i32 = arith.constant 0 : i32
    %c0_i32_0 = arith.constant 0 : i32
    return %arg0, %c0_i32 : i32, i32
  }
  func.func @transform_1(%arg0: i32) -> (i32, i32) {
    %c0_i32 = arith.constant 0 : i32
    %c0_i32_0 = arith.constant 0 : i32
    %c0_i32_1 = arith.constant 0 : i32
    return %c0_i32, %c0_i32_0 : i32, i32
  }
  func.func @transform_2(%arg0: i32) -> (i32, i32) {
    %c0_i32 = arith.constant 0 : i32
    %c0_i32_0 = arith.constant 0 : i32
    %c0_i32_1 = arith.constant 0 : i32
    return %c0_i32, %c0_i32_0 : i32, i32
  }
  func.func @transform_3(%arg0: i32) -> (i32, i32) {
    %c0_i32 = arith.constant 0 : i32
    %c0_i32_0 = arith.constant 0 : i32
    return %arg0, %c0_i32 : i32, i32
  }
}

</mosaic_0001>

<llo_original>
// kernel: logistic_regression_forward.1
$region0: #{logistic_regression_forward.1}
  #allocation0 [shape = 'u32[]', space=smem, size = 0x4, offset = 0x4, fixed_abs, tag = 'smem constant byte address 0x4 - core index']
  #allocation1 [shape = 'u32[144,128]{1,0:T(1,128)}', space=vmem, size = 0x12000, scoped, tag = 'internal scratch']
  %s0 = inlined_call_operand.vmem [shape: f32[8,32], index: 0, kind: input, shape index: {}]
  %s1 = inlined_call_operand.vmem [shape: f32[32,16], index: 1, kind: input, shape index: {}]
  %s2 = inlined_call_operand.vmem [shape: f32[1,16], index: 2, kind: input, shape index: {}]
  %s3 = inlined_call_operand.hbm [shape: f32[8,16], index: 3, kind: output, shape index: {}]
  %s4 = sld [smem:[#allocation0]]
  $region22: #{logistic_regression_forward.1} parent=0
    _
  %s6 = ssub.s32 1, %s4
  %s7 = scalar_select 0, %s6, %s4
  $region1: #{logistic_regression_forward.1} parent=0
    #allocation2 [shape = 'u8[4096]{0}', space=vmem, size = 0x1000, scoped, tag = 'output window, operand 0, single buffered']
    #allocation3 [shape = 's32[1]{0}', space=sflag, size = 0x4, scoped, tag = 'scoped memory for logistic_regression_forward.1']
    %8 = vsyncpa [#allocation3], 0
    // Predicated region
    $region2: #{logistic_regression_forward.1} parent=1 // pred_check
      _
    $region3: #{logistic_regression_forward.1} parent=1 // pred_check_branch
      %10 = sbr.rel (0) target = $region5
    $region4: #{logistic_regression_forward.1} parent=1 // pred_region
      _
    $region5: #{logistic_regression_forward.1} parent=1 // pred_fallthru
      _
    // Predicated region
    $region6: #{logistic_regression_forward.1} parent=1 // pred_check
      _
    $region7: #{logistic_regression_forward.1} parent=1 // pred_check_branch
      %12 = sbr.rel (0) target = $region9
    $region8: #{logistic_regression_forward.1} parent=1 // pred_region
      _
    $region9: #{logistic_regression_forward.1} parent=1 // pred_fallthru
      _
    // Predicated region
    $region10: #{logistic_regression_forward.1} parent=1 // pred_check
      _
    $region11: #{logistic_regression_forward.1} parent=1 // pred_check_branch
      %14 = sbr.rel (0) target = $region13
    $region12: #{logistic_regression_forward.1} parent=1 // pred_region
      _
    $region13: #{logistic_regression_forward.1} parent=1 // pred_fallthru
      _
    %v15 = vld [vmem:[%s0] sm:$0xff]
    %v16 = vld [vmem:[%s1] sm:$0xff]
    %v17 = vld [vmem:[%s1 + $0x8] sm:$0xff]
    %v18 = vld [vmem:[%s1 + $0x10] sm:$0xff]
    %v19 = vld [vmem:[%s1 + $0x18] sm:$0xff]
    %v20 = vld [vmem:[%s2] sm:$0x1]
    %v22 = vlaneseq
    %v23 = vshrl.u32 %v22, 7
    %v24 = vsub.s32 0, %v23
    %v25 = vrot.slane %v20, %v24
    %vm27 = vcmask 261120
    %v29 = vsel %vm27, %v15, 0
    %31 = vmatprep.subr.mxu0 0.0
    %32 = vmatpush1.msra.mxu0 %v16
    %33 = vmatprep.subr.mxu0 0.0
    %34 = vmatpush1.msra.mxu0 %v17
    %35 = vmatprep.subr.mxu0 0.0
    %36 = vmatpush1.msra.mxu0 %v18
    %37 = vmatprep.subr.mxu0 0.0
    %38 = vmatpush1.msra.mxu0 %v19
    %39 = vmatprep.subr.mxu0 0.0
    %40 = vmatpush1.msra.mxu0 0.0
    %41 = vmatprep.subr.mxu0 0.0
    %42 = vmatpush1.msra.mxu0 0.0
    %43 = vmatprep.subr.mxu0 0.0
    %44 = vmatpush1.msra.mxu0 0.0
    %45 = vmatprep.subr.mxu0 0.0
    %46 = vmatpush1.msra.mxu0 0.0
    %47 = vmatprep.subr.mxu0 0.0
    %48 = vmatpush1.msra.mxu0 0.0
    %49 = vmatprep.subr.mxu0 0.0
    %50 = vmatpush1.msra.mxu0 0.0
    %51 = vmatprep.subr.mxu0 0.0
    %52 = vmatpush1.msra.mxu0 0.0
    %53 = vmatprep.subr.mxu0 0.0
    %54 = vmatpush1.msra.mxu0 0.0
    %55 = vmatprep.subr.mxu0 0.0
    %56 = vmatpush1.msra.mxu0 0.0
    %57 = vmatprep.subr.mxu0 0.0
    %58 = vmatpush1.msra.mxu0 0.0
    %59 = vmatprep.subr.mxu0 0.0
    %60 = vmatpush1.msra.mxu0 0.0
    %61 = vmatprep.subr.mxu0 0.0
    %62 = vmatpush1.msra.mxu0 0.0
    %63 = vmatprep.subr.mxu0 0.0
    %64 = vmatpush1.msra.mxu0 0.0
    %65 = vmatprep.subr.mxu0 0.0
    %66 = vmatpush1.msra.mxu0 0.0
    %67 = vmatprep.subr.mxu0 0.0
    %68 = vmatpush1.msra.mxu0 0.0
    %69 = vmatprep.subr.mxu0 0.0
    %70 = vmatpush1.msra.mxu0 0.0
    %71 = vmatprep.subr.mxu0 0.0
    %72 = vmatpush1.msra.mxu0 0.0
    %73 = vmatprep.subr.mxu0 0.0
    %74 = vmatpush1.msra.mxu0 0.0
    %75 = vmatprep.subr.mxu0 0.0
    %76 = vmatpush1.msra.mxu0 0.0
    %77 = vmatprep.subr.mxu0 0.0
    %78 = vmatpush1.msra.mxu0 0.0
    %79 = vmatprep.subr.mxu0 0.0
    %80 = vmatpush1.msra.mxu0 0.0
    %81 = vmatprep.subr.mxu0 0.0
    %82 = vmatpush1.msra.mxu0 0.0
    %83 = vmatprep.subr.mxu0 0.0
    %84 = vmatpush1.msra.mxu0 0.0
    %85 = vmatprep.subr.mxu0 0.0
    %86 = vmatpush1.msra.mxu0 0.0
    %87 = vmatprep.subr.mxu0 0.0
    %88 = vmatpush1.msra.mxu0 0.0
    %89 = vmatprep.subr.mxu0 0.0
    %90 = vmatpush1.msra.mxu0 0.0
    %91 = vmatprep.subr.mxu0 0.0
    %92 = vmatpush1.msra.mxu0 0.0
    %93 = vmatprep.subr.mxu0 0.0
    %94 = vmatpush1.msra.mxu0 0.0
    %95 = vmatprep.mubr.f32.mxu0 0.0
    %96 = vmatmul.mubr.f32.gmra.mrb[0].mxu0 %v29
    %v97 = vpop.f32.mrb[0].mxu0
    %v98 = vadd.f32 %v25, %v97
    %v99 = vpop.f32.mrb[0].mxu0
    %100 = vdwg.mxu0
    %vm101 = vcmask 130048
    %v102 = vsel %vm101, %v98, -inf
    %103 = vmax.xlane.f32.xlu0 %v102
    %v104 = vpop.xlane.xlu0 %103
    %v105 = vsub.f32 %v98, %v104
    %v106 = vmul.f32 %v105, 1.442695
    %v107 = vpow.pop %v106
    %v108 = vsel %vm101, %v107, 0.0
    %109 = vadd.xlane.f32.xlu0 %v108
    %v110 = vpop.xlane.xlu0 %109
    %v111 = vrcp.pop %v110
    %v112 = vmul.f32 %v107, %v111
    %113 = vst.msk [vmem:[#allocation2] sm:$0xff] %vm101, %v112
    // Predicated region
    $region14: #{logistic_regression_forward.1} parent=1 // pred_check
      _
    $region15: #{logistic_regression_forward.1} parent=1 // pred_check_branch
      %115 = sbr.rel (0) target = $region17
    $region16: #{logistic_regression_forward.1} parent=1 // pred_region
      %s117 = ssub.s32 128, 128
      %118 = vsyncadd [#allocation3], %s117
      %s120 = sshll.u32 [#allocation2], 4
      %s121 = int_to_ptr.vmem [resolvable:$true] %s120
      %123 = dma.vmem_to_hbm [thread:$0]  %s121, 128, %s3, [#allocation3]
    $region17: #{logistic_regression_forward.1} parent=1 // pred_fallthru
      _
    // Predicated region
    $region18: #{logistic_regression_forward.1} parent=1 // pred_check
      _
    $region19: #{logistic_regression_forward.1} parent=1 // pred_check_branch
      %125 = sbr.rel (0) target = $region21
    $region20: #{logistic_regression_forward.1} parent=1 // pred_region
      %126 = dma.done [#allocation3], 128
    $region21: #{logistic_regression_forward.1} parent=1 // pred_fallthru
      _
    %127 = vsyncpa [#allocation3], 1

</llo_original>
